<compile_context>
chip_gen: v5e
topology: v5e:2x2
jax: 0.10.0
libtpu: 0.0.40
codegen_flags: <defaults>
</compile_context>

<pallas_src>
import numpy as np
import jax
import jax.numpy as jnp
from jax.experimental import pallas as pl
from jax.experimental.pallas import tpu as pltpu


# ----------------------------------------------------------------------------
# Pallas kernel: CHUNK Euler steps per grid iteration, psi resident in out_ref.
# ----------------------------------------------------------------------------
def _make_ednn_kernel(chunk):
    def kernel(hrT_ref, hiT_ref, p0_ref, out_ref):
        c = pl.program_id(0)

        # out_ref is the resident psi accumulator; seed it from psi0 once.
        @pl.when(c == 0)
        def _():
            out_ref[...] = p0_ref[...]

        def body(s, psi):
            # (D, D) dt-scaled, pre-transposed Hamiltonian planes for this step.
            HrT = hrT_ref[s]
            HiT = hiT_ref[s]
            # psi rows: [pr; pi].  Two fused (2,D)@(D,D) MXU dots:
            #   a rows = [pr@HrT, pi@HrT],  b rows = [pr@HiT, pi@HiT]
            a = jnp.dot(psi, HrT, preferred_element_type=jnp.float32)
            b = jnp.dot(psi, HiT, preferred_element_type=jnp.float32)
            # dpsi = -i * (dt*H) @ psi  split into real/imag (row-vector form):
            #   dpr = pi@HrT + pr@HiT ,  dpi = pi@HiT - pr@HrT
            dpr = a[1:2, :] + b[0:1, :]
            dpi = b[1:2, :] - a[0:1, :]
            return psi + jnp.concatenate([dpr, dpi], axis=0)

        psi = jax.lax.fori_loop(0, chunk, body, out_ref[...],
                                unroll=bool(chunk <= 16))
        out_ref[...] = psi

    return kernel


def ednn_forward_pallas(coeffs, ops_r, ops_i, psi0_r, psi0_i,
                        *, step_budget_bytes=8 << 20):
    """Returns psi(ts[-1]) as (real, imag) length-D vectors."""
    S1, K = coeffs.shape
    _, D, _ = ops_r.shape

    psi0 = jnp.concatenate(
        [jnp.reshape(psi0_r, (1, D)), jnp.reshape(psi0_i, (1, D))],
        axis=0).astype(jnp.float32)
    if S1 == 0:
        return psi0[0], psi0[1]

    # Pre-transpose the operator stack once (no .T inside the kernel).
    opsT_r = jnp.swapaxes(ops_r, 1, 2)
    opsT_i = jnp.swapaxes(ops_i, 1, 2)

    # Chunk the time axis so each streamed H^T tile (per plane, per pipeline
    # buffer) stays under step_budget_bytes -> double-buffered footprint is
    # <= ~4x budget, comfortably inside v5e/v6e/v7x VMEM.
    d_sub = ((D + 7) // 8) * 8
    d_lane = ((D + 127) // 128) * 128
    per_step_bytes = d_sub * d_lane * 4                 # one padded f32 plane
    chunk = int(max(1, min(S1, step_budget_bytes // per_step_bytes)))
    grid = (S1 + chunk - 1) // chunk
    pad = grid * chunk - S1

    # Zero-pad trailing steps: H = 0  =>  psi unchanged.
    coeffs_p = jnp.pad(coeffs.astype(jnp.float32), ((0, pad), (0, 0)))

    # One batched MXU matmul builds every per-step, dt-scaled (transposed)
    # Hamiltonian up front: (S_pad, K) x (K, D, D) -> (S_pad, D, D).
    HrT = jnp.einsum('sk,kij->sij', coeffs_p, opsT_r).astype(jnp.float32)
    HiT = jnp.einsum('sk,kij->sij', coeffs_p, opsT_i).astype(jnp.float32)

    # Scoped-VMEM sizing: 2 planes x 2 pipeline buffers x chunk tile + slack.
    vmem_bytes = 2 * 2 * chunk * per_step_bytes + (2 << 20)
    vmem_bytes = int(min(max(vmem_bytes, 16 << 20), 48 << 20))

    kernel = _make_ednn_kernel(chunk)
    out = pl.pallas_call(
        kernel,
        grid_spec=pltpu.PrefetchScalarGridSpec(
            num_scalar_prefetch=0,
            grid=(grid,),
            in_specs=[
                pl.BlockSpec((chunk, D, D), lambda c: (c, 0, 0)),   # HrT tiles
                pl.BlockSpec((chunk, D, D), lambda c: (c, 0, 0)),   # HiT tiles
                pl.BlockSpec((2, D), lambda c: (0, 0)),             # psi0
            ],
            out_specs=pl.BlockSpec((2, D), lambda c: (0, 0)),       # psi (resident)
        ),
        out_shape=jax.ShapeDtypeStruct((2, D), jnp.float32),
        compiler_params=pltpu.CompilerParams(
            dimension_semantics=("arbitrary",),
            vmem_limit_bytes=vmem_bytes),
    )(HrT, HiT, psi0)
    return out[0], out[1]


# ----------------------------------------------------------------------------
# Plain-JAX / numpy glue: operator construction + time-dependent coefficients.
# ----------------------------------------------------------------------------
_SX = np.array([[0, 1], [1, 0]], dtype=np.complex64)
_SY = np.array([[0, -1j], [1j, 0]], dtype=np.complex64)
_SZ = np.array([[1, 0], [0, -1]], dtype=np.complex64)
_I2 = np.eye(2, dtype=np.complex64)


def _get_op(s):
    return {'x': _SX, 'X': _SX, 'y': _SY, 'Y': _SY, 'z': _SZ, 'Z': _SZ}[s]


def _add_op(ops, sites, N):
    l = [_I2 for _ in range(N)]
    for s in range(len(sites)):
        l[sites[s]] = ops[s]
    m = l[0]
    for s in range(1, N):
        m = np.kron(m, l[s])
    return m


def build_operators(N, Graph, Fields):
    """Stack of K = len(Graph)+len(Fields) many D x D operators (real/imag)."""
    ops = []
    for term in Graph:
        k = len(term) // 2
        ops.append(_add_op([_get_op(term[i]) for i in range(k)], term[k:], N))
    for term in Fields:
        ops.append(_add_op([_get_op(term[0])], term[1:], N))
    ops = np.stack(ops).astype(np.complex64)          # (K, D, D)
    return jnp.asarray(ops.real, jnp.float32), jnp.asarray(ops.imag, jnp.float32)


def compute_coeffs(ts, Js, vs, T, n_basis, constraint=True, basis='Fourier'):
    """Per-Euler-step, dt-scaled scalar weight of each operator: (S-1, K)."""
    t = ts[:-1]                       # (S-1,)
    dt = ts[1:] - ts[:-1]             # (S-1,)
    # Coupling (constant) weights.
    g = 2.0 * jax.nn.sigmoid(Js) - 1.0 if constraint else Js          # (G,)
    cg = jnp.broadcast_to(g[None, :], (t.shape[0], Js.shape[0]))
    # Field weights.
    ks = jnp.arange(n_basis, dtype=jnp.float32)
    if basis == 'Fourier':
        bvals = jnp.cos(2.0 * jnp.pi * (t[:, None] / T) * ks[None, :])  # (S-1, nb)
    elif basis == 'poly':
        bvals = (t[:, None] / T) ** ks[None, :]
    else:
        raise NotImplementedError("Legendre basis not implemented")
    u = bvals @ vs.T                                                    # (S-1, F)
    cf = 2.0 * jax.nn.sigmoid(u) - 1.0 if constraint else u
    return (jnp.concatenate([cg, cf], axis=1) * dt[:, None]).astype(jnp.float32)


def reference_forward(coeffs, ops_r, ops_i, psi0_r, psi0_i):
    """Pure-JAX Euler reference (column-vector form, same real/imag split)."""
    pr, pi_ = psi0_r, psi0_i
    for k in range(coeffs.shape[0]):
        Hr = jnp.einsum('k,kij->ij', coeffs[k], ops_r)
        Hi = jnp.einsum('k,kij->ij', coeffs[k], ops_i)
        dpr = Hr @ pi_ + Hi @ pr
        dpi = Hi @ pi_ - Hr @ pr
        pr, pi_ = pr + dpr, pi_ + dpi
    return pr, pi_


# ----------------------------------------------------------------------------
if __name__ == "__main__":
    # Small, deterministic EDNN instance.
    N = 3                                  # qubits -> D = 2^N = 8
    D = 2 ** N
    T = 1.0
    n_basis = 5
    Graph = [('z', 'z', 0, 1), ('z', 'z', 1, 2)]       # ZZ couplings
    Fields = [('x', 0), ('x', 1), ('x', 2)]            # X drive fields

    key = jax.random.PRNGKey(0)
    kJ, kV = jax.random.split(key)
    Js = jax.random.uniform(kJ, (len(Graph),), jnp.float32)            # ~ torch.rand
    vs = jax.random.uniform(kV, (len(Fields), n_basis), jnp.float32)   # ~ torch.rand

    ts = jnp.linspace(0.0, T, 34, dtype=jnp.float32)   # 34 times -> 33 Euler steps

    # x0 = |0...0>
    psi0_r = jnp.zeros((D,), jnp.float32).at[0].set(1.0)
    psi0_i = jnp.zeros((D,), jnp.float32)

    ops_r, ops_i = build_operators(N, Graph, Fields)               # (K, D, D) each
    coeffs = compute_coeffs(ts, Js, vs, T, n_basis)                # (S-1, K)

    ref_r, ref_i = reference_forward(coeffs, ops_r, ops_i, psi0_r, psi0_i)

    # Default path: all steps fit one chunk -> single grid iteration.
    out_r, out_i = ednn_forward_pallas(coeffs, ops_r, ops_i, psi0_r, psi0_i)
    out_r, out_i = jax.block_until_ready((out_r, out_i))
    assert np.allclose(np.asarray(out_r), np.asarray(ref_r), atol=2e-3), "real mismatch"
    assert np.allclose(np.asarray(out_i), np.asarray(ref_i), atol=2e-3), "imag mismatch"

    # Tiny per-chunk budget: exercises streamed H tiles, multi-chunk resident
    # psi carry, and zero-padded trailing steps (chunk=4, grid=9, pad=3).
    out_r2, out_i2 = ednn_forward_pallas(
        coeffs, ops_r, ops_i, psi0_r, psi0_i,
        step_budget_bytes=4 * (8 * 128 * 4))
    out_r2, out_i2 = jax.block_until_ready((out_r2, out_i2))
    assert np.allclose(np.asarray(out_r2), np.asarray(ref_r), atol=2e-3), "real mismatch (chunked)"
    assert np.allclose(np.asarray(out_i2), np.asarray(ref_i), atol=2e-3), "imag mismatch (chunked)"

    print("KERNEL_OK")
</pallas_src>

<mosaic_0001>
module attributes {stable_mosaic.version = 11 : i64} {
  func.func @kernel(%arg0: i32, %arg1: memref<33x8x8xf32, #tpu.memory_space<vmem>>, %arg2: memref<33x8x8xf32, #tpu.memory_space<vmem>>, %arg3: memref<2x8xf32, #tpu.memory_space<vmem>>, %arg4: memref<2x8xf32, #tpu.memory_space<vmem>>) attributes {dimension_semantics = [#tpu.dimension_semantics<arbitrary>], iteration_bounds = array<i64: 1>, scalar_prefetch = 0 : i64, scratch_operands = 0 : i64, tpu.core_type = #tpu.core_type<tc>, window_params = [{transform_indices = @transform_0, window_bounds = array<i64: 33, 8, 8>}, {transform_indices = @transform_1, window_bounds = array<i64: 33, 8, 8>}, {pipeline_mode = #tpu.pipeline_mode<synchronous>, transform_indices = @transform_2, window_bounds = array<i64: 2, 8>}, {pipeline_mode = #tpu.pipeline_mode<synchronous>, transform_indices = @transform_3, window_bounds = array<i64: 2, 8>}]} {
    %c0_i32 = arith.constant 0 : i32
    %0 = arith.cmpi eq, %arg0, %c0_i32 : i32
    %1 = arith.extui %0 : i1 to i32
    %c0_i32_0 = arith.constant 0 : i32
    %2 = arith.cmpi ne, %1, %c0_i32_0 : i32
    scf.if %2 {
      %c0_6 = arith.constant 0 : index
      %c0_7 = arith.constant 0 : index
      %7 = vector.load %arg3[%c0_6, %c0_7] : memref<2x8xf32, #tpu.memory_space<vmem>>, vector<2x8xf32>
      %c0_8 = arith.constant 0 : index
      %c0_9 = arith.constant 0 : index
      %8 = vector.load %arg4[%c0_8, %c0_9] : memref<2x8xf32, #tpu.memory_space<vmem>>, vector<2x8xf32>
      tpu.vector_store %arg4[%c0_8, %c0_9], %7 {strides = array<i32>} : memref<2x8xf32, #tpu.memory_space<vmem>>, vector<2x8xf32>,
    } else {
    }
    %c0 = arith.constant 0 : index
    %c0_1 = arith.constant 0 : index
    %3 = vector.load %arg4[%c0, %c0_1] : memref<2x8xf32, #tpu.memory_space<vmem>>, vector<2x8xf32>
    %c0_i32_2 = arith.constant 0 : i32
    %c33_i32 = arith.constant 33 : i32
    %4 = arith.addi %c0_i32_2, %c33_i32 : i32
    %c1_i32 = arith.constant 1 : i32
    %5 = scf.for %arg5 = %c0_i32_2 to %4 step %c1_i32 iter_args(%arg6 = %3) -> (vector<2x8xf32>)  : i32 {
      %7 = arith.index_cast %arg5 : i32 to index
      %c0_6 = arith.constant 0 : index
      %c0_7 = arith.constant 0 : index
      %8 = vector.load %arg1[%7, %c0_6, %c0_7] : memref<33x8x8xf32, #tpu.memory_space<vmem>>, vector<1x8x8xf32>
      %9 = vector.shape_cast %8 : vector<1x8x8xf32> to vector<8x8xf32>
      %10 = arith.index_cast %arg5 : i32 to index
      %c0_8 = arith.constant 0 : index
      %c0_9 = arith.constant 0 : index
      %11 = vector.load %arg2[%10, %c0_8, %c0_9] : memref<33x8x8xf32, #tpu.memory_space<vmem>>, vector<1x8x8xf32>
      %12 = vector.shape_cast %11 : vector<1x8x8xf32> to vector<8x8xf32>
      %cst = arith.constant dense<0.000000e+00> : vector<2x8xf32>
      %13 = tpu.matmul %arg6, %9, %cst {dimension_numbers = #tpu.dot_dimension_numbers<[1], [0], [0], [1], [0, 0, 1, 1], [], []>} : vector<2x8xf32>, vector<8x8xf32>, vector<2x8xf32> -> vector<2x8xf32>
      %cst_10 = arith.constant dense<0.000000e+00> : vector<2x8xf32>
      %14 = tpu.matmul %arg6, %12, %cst_10 {dimension_numbers = #tpu.dot_dimension_numbers<[1], [0], [0], [1], [0, 0, 1, 1], [], []>} : vector<2x8xf32>, vector<8x8xf32>, vector<2x8xf32> -> vector<2x8xf32>
      %15 = vector.extract_strided_slice %13 {offsets = [1, 0], sizes = [1, 8], strides = [1, 1]} : vector<2x8xf32> to vector<1x8xf32>
      %16 = vector.extract_strided_slice %14 {offsets = [0, 0], sizes = [1, 8], strides = [1, 1]} : vector<2x8xf32> to vector<1x8xf32>
      %17 = arith.addf %15, %16 : vector<1x8xf32>
      %18 = vector.extract_strided_slice %14 {offsets = [1, 0], sizes = [1, 8], strides = [1, 1]} : vector<2x8xf32> to vector<1x8xf32>
      %19 = vector.extract_strided_slice %13 {offsets = [0, 0], sizes = [1, 8], strides = [1, 1]} : vector<2x8xf32> to vector<1x8xf32>
      %20 = arith.subf %18, %19 : vector<1x8xf32>
      %21 = tpu.concatenate %17, %20 in 0 : vector<1x8xf32>, vector<1x8xf32> -> vector<2x8xf32>
      %22 = arith.addf %arg6, %21 : vector<2x8xf32>
      scf.yield %22 : vector<2x8xf32>
    }
    %c33_i32_3 = arith.constant 33 : i32
    %c0_4 = arith.constant 0 : index
    %c0_5 = arith.constant 0 : index
    %6 = vector.load %arg4[%c0_4, %c0_5] : memref<2x8xf32, #tpu.memory_space<vmem>>, vector<2x8xf32>
    tpu.vector_store %arg4[%c0_4, %c0_5], %5 {strides = array<i32>} : memref<2x8xf32, #tpu.memory_space<vmem>>, vector<2x8xf32>,
    return
  }
  func.func @transform_0(%arg0: i32) -> (i32, i32, i32) {
    %c0_i32 = arith.constant 0 : i32
    %c0_i32_0 = arith.constant 0 : i32
    %c0_i32_1 = arith.constant 0 : i32
    return %arg0, %c0_i32, %c0_i32_0 : i32, i32, i32
  }
  func.func @transform_1(%arg0: i32) -> (i32, i32, i32) {
    %c0_i32 = arith.constant 0 : i32
    %c0_i32_0 = arith.constant 0 : i32
    %c0_i32_1 = arith.constant 0 : i32
    return %arg0, %c0_i32, %c0_i32_0 : i32, i32, i32
  }
  func.func @transform_2(%arg0: i32) -> (i32, i32) {
    %c0_i32 = arith.constant 0 : i32
    %c0_i32_0 = arith.constant 0 : i32
    %c0_i32_1 = arith.constant 0 : i32
    return %c0_i32, %c0_i32_0 : i32, i32
  }
  func.func @transform_3(%arg0: i32) -> (i32, i32) {
    %c0_i32 = arith.constant 0 : i32
    %c0_i32_0 = arith.constant 0 : i32
    %c0_i32_1 = arith.constant 0 : i32
    return %c0_i32, %c0_i32_0 : i32, i32
  }
}

</mosaic_0001>

<llo_original>
// kernel: tpu_custom_call.1
$region0: #{tpu_custom_call.1}
  #allocation0 [shape = 'u32[]', space=smem, size = 0x4, offset = 0x4, fixed_abs, tag = 'smem constant byte address 0x4 - core index']
  #allocation1 [shape = 'u32[72,128]{1,0:T(1,128)}', space=vmem, size = 0x9000, scoped, tag = 'internal scratch']
  %s0 = inlined_call_operand.vmem [shape: f32[33,8,8], index: 0, kind: input, shape index: {}]
  %s1 = inlined_call_operand.vmem [shape: f32[33,8,8], index: 1, kind: input, shape index: {}]
  %s2 = inlined_call_operand.vmem [shape: f32[2,8], index: 2, kind: input, shape index: {}]
  %s3 = inlined_call_operand.hbm [shape: f32[2,8], index: 3, kind: output, shape index: {}]
  %s4 = sld [smem:[#allocation0]]
  $region33: #{tpu_custom_call.1} parent=0
    _
  %s6 = ssub.s32 1, %s4
  %s7 = scalar_select 0, %s6, %s4
  $region1: #{tpu_custom_call.1} parent=0
    #allocation2 [shape = 'u8[1024]{0}', space=vmem, size = 0x400, scoped, tag = 'output window, operand 0, single buffered']
    #allocation3 [shape = 's32[1]{0}', space=sflag, size = 0x4, scoped, tag = 'scoped memory for tpu_custom_call.1']
    %8 = vsyncpa [#allocation3], 0
    // Predicated region
    $region2: #{tpu_custom_call.1} parent=1 // pred_check
      _
    $region3: #{tpu_custom_call.1} parent=1 // pred_check_branch
      %10 = sbr.rel (0) target = $region5
    $region4: #{tpu_custom_call.1} parent=1 // pred_region
      _
    $region5: #{tpu_custom_call.1} parent=1 // pred_fallthru
      _
    // Predicated region
    $region6: #{tpu_custom_call.1} parent=1 // pred_check
      _
    $region7: #{tpu_custom_call.1} parent=1 // pred_check_branch
      %12 = sbr.rel (0) target = $region9
    $region8: #{tpu_custom_call.1} parent=1 // pred_region
      _
    $region9: #{tpu_custom_call.1} parent=1 // pred_fallthru
      _
    // Predicated region
    $region10: #{tpu_custom_call.1} parent=1 // pred_check
      _
    $region11: #{tpu_custom_call.1} parent=1 // pred_check_branch
      %14 = sbr.rel (0) target = $region13
    $region12: #{tpu_custom_call.1} parent=1 // pred_region
      _
    $region13: #{tpu_custom_call.1} parent=1 // pred_fallthru
      _
    %p15 = scmp.eq.s32.totalorder 0, 0
    // Predicated region
    $region14: #{tpu_custom_call.1} parent=1 // pred_check
      %p16 = pneg %p15
    $region15: #{tpu_custom_call.1} parent=1 // pred_check_branch
      %18 = sbr.rel (%p16) target = $region17
    $region16: #{tpu_custom_call.1} parent=1 // pred_region
      %v19 = vld [vmem:[%s2] sm:$0x3]
      %vm20 = vcmask 58368
      %21 = vst.msk [vmem:[#allocation2] sm:$0x3] %vm20, %v19
    $region17: #{tpu_custom_call.1} parent=1 // pred_fallthru
      _
    %v22 = vld [vmem:[#allocation2] sm:$0x3]
    loop: start=0, step=1, limit=33
    $region18: #{tpu_custom_call.1} parent=1 // loop_pre_header
      _
    $region19: #{tpu_custom_call.1} parent=1 // loop_header
      %s24 = sphi 0, %s28
      %p25 = scmp.ge.s32.totalorder %s24, 33
      %v29 = vphi %v22, %v92
    $region20: #{tpu_custom_call.1} parent=1 // loop_header_branch
      %27 = sbr.rel (%p25) target = $region24
    $region21: #{tpu_custom_call.1} parent=1 // loop_body
      %s30 = smul.u32 %s24, 8
      %s31 = scalar_lea.vmem %s0, %s30
      %v32 = vld [vmem:[%s31] sm:$0xff]
      %s33 = scalar_lea.vmem %s1, %s30
      %v34 = vld [vmem:[%s33] sm:$0xff]
      %vm35 = vcmask 64512
      %v37 = vsel %vm35, %v29, 0
      %39 = vmatpush.msra.mxu0 0.0
      %40 = vmatpush.msra.mxu0 0.0
      %41 = vmatpush.msra.mxu0 0.0
      %42 = vmatpush.msra.mxu0 0.0
      %43 = vmatpush.msra.mxu0 0.0
      %44 = vmatpush.msra.mxu0 0.0
      %45 = vmatpush.msra.mxu0 0.0
      %46 = vmatpush.msra.mxu0 0.0
      %47 = vmatpush.msra.mxu0 0.0
      %48 = vmatpush.msra.mxu0 0.0
      %49 = vmatpush.msra.mxu0 0.0
      %50 = vmatpush.msra.mxu0 0.0
      %51 = vmatpush.msra.mxu0 0.0
      %52 = vmatpush.msra.mxu0 0.0
      %53 = vmatpush.msra.mxu0 0.0
      %54 = vmatpush.msra.mxu0 %v32
      %55 = vmatmul.f32.gmra.mxu0 %v37
      %v56 = vpop.f32.mrf.mxu0
      %v57 = vadd.f32 0.0, %v56
      %58 = vdwg.mxu0
      %59 = vmatpush.msra.mxu0 0.0
      %60 = vmatpush.msra.mxu0 0.0
      %61 = vmatpush.msra.mxu0 0.0
      %62 = vmatpush.msra.mxu0 0.0
      %63 = vmatpush.msra.mxu0 0.0
      %64 = vmatpush.msra.mxu0 0.0
      %65 = vmatpush.msra.mxu0 0.0
      %66 = vmatpush.msra.mxu0 0.0
      %67 = vmatpush.msra.mxu0 0.0
      %68 = vmatpush.msra.mxu0 0.0
      %69 = vmatpush.msra.mxu0 0.0
      %70 = vmatpush.msra.mxu0 0.0
      %71 = vmatpush.msra.mxu0 0.0
      %72 = vmatpush.msra.mxu0 0.0
      %73 = vmatpush.msra.mxu0 0.0
      %74 = vmatpush.msra.mxu0 %v34
      %75 = vmatmul.f32.gmra.mxu0 %v37
      %v76 = vpop.f32.mrf.mxu0
      %v77 = vadd.f32 0.0, %v76
      %78 = vdwg.mxu0
      %v80 = vrot.slane %v77, 7
      %v82 = vadd.f32 %v57, %v80
      %v84 = vrot.slane %v57, 7
      %v86 = vsub.f32 %v77, %v84
      %v88 = vrot.slane %v82, 1
      %vm90 = vcmask 1040384
      %v91 = vsel %vm90, %v88, %v86
      %v92 = vadd.f32 %v29, %v91
    $region22: #{tpu_custom_call.1} parent=1 // loop_footer
      %s28 = sadd.s32 1, %s24
    $region23: #{tpu_custom_call.1} parent=1 // loop_footer_branch
      %23 = sbr.rel target = $region19
    $region24: #{tpu_custom_call.1} parent=1 // loop_exit
      _
    %vm93 = vcmask 58368
    %94 = vst.msk [vmem:[#allocation2] sm:$0x3] %vm93, %v29
    // Predicated region
    $region25: #{tpu_custom_call.1} parent=1 // pred_check
      _
    $region26: #{tpu_custom_call.1} parent=1 // pred_check_branch
      %96 = sbr.rel (0) target = $region28
    $region27: #{tpu_custom_call.1} parent=1 // pred_region
      %98 = vsyncadd [#allocation3], 0
      %s100 = sshll.u32 [#allocation2], 4
      %s101 = int_to_ptr.vmem [resolvable:$true] %s100
      %s102 = sshll.u32 %s3, 4
      %s103 = int_to_ptr.hbm [resolvable:$true] %s102
      %105 = dma.vmem_to_hbm [thread:$0]  %s101, 32, %s103, [#allocation3]
    $region28: #{tpu_custom_call.1} parent=1 // pred_fallthru
      _
    // Predicated region
    $region29: #{tpu_custom_call.1} parent=1 // pred_check
      _
    $region30: #{tpu_custom_call.1} parent=1 // pred_check_branch
      %107 = sbr.rel (0) target = $region32
    $region31: #{tpu_custom_call.1} parent=1 // pred_region
      %109 = dma.done [#allocation3], 32
    $region32: #{tpu_custom_call.1} parent=1 // pred_fallthru
      _
    %110 = vsyncpa [#allocation3], 1

</llo_original>
